<compile_context>
chip_gen: v7x
topology: tpu7x:2x2x1
jax: 0.10.0
libtpu: 0.0.40
codegen_flags: <defaults>
</compile_context>

<pallas_src>
import jax
import jax.numpy as jnp
from jax.experimental import pallas as pl
from jax.experimental.pallas import tpu as pltpu

_VMEM_CAP = 48 * 1024 * 1024   # leave headroom under v7x's 64 MiB / TensorCore


def _auto_epilogue_dtype(compute_dtype):
    """bf16 epilogue only where the VPU/EUP support bf16 (v6e and newer)."""
    try:
        kind = jax.devices()[0].device_kind.lower()
    except Exception:  # pragma: no cover - be conservative
        return jnp.dtype(jnp.float32)
    for old in ("v2", "v3", "v4", "v5"):
        if old in kind:
            return jnp.dtype(jnp.float32)
    return jnp.dtype(compute_dtype)


def _make_kernel(D, compute_dtype, epilogue_dtype, reduce_c1):
    """Fused kernel: one (L,2D) MXU pass, gated epilogue, compact final head."""

    def kernel(x_ref, wab_ref, bab_ref, wc_ref, bc_ref, out_ref):
        # Cast to the MXU compute dtype inside the kernel (x streamed as-is).
        x = x_ref[...].astype(compute_dtype)
        # Single fused projection for attention_a and attention_b.
        z = jnp.dot(x, wab_ref[...], preferred_element_type=jnp.float32)
        z = z + bab_ref[...]                           # (tile_n, 2D) f32
        # Lane-aligned split; transcendentals + gating in the epilogue dtype
        # (bf16 on v6e/v7x -> EUP/VPU throughput doubles, f32 on v5e).
        a = jnp.tanh(z[:, :D].astype(epilogue_dtype))
        g = jax.nn.sigmoid(z[:, D:].astype(epilogue_dtype))
        gated = a * g                                   # (tile_n, D)
        if reduce_c1:
            # n_classes == 1: VPU multiply + XLU lane reduction (MXU stays
            # free), f32 accumulation, compact (tile_n, 1) store.
            prod = (gated * wc_ref[...]).astype(jnp.float32)
            out = jnp.sum(prod, axis=-1, keepdims=True) + bc_ref[...]
        else:
            # General n_classes: unpadded (D, C) MXU tail, compact store.
            out = jnp.dot(gated.astype(compute_dtype), wc_ref[...],
                          preferred_element_type=jnp.float32) + bc_ref[...]
        out_ref[...] = out.astype(out_ref.dtype)

    return kernel


def attn_net_gated(x, wa, ba, wb, bb, wc, bc, *, tile_n=1024,
                   compute_dtype=jnp.bfloat16, epilogue_dtype=None):
    """Forward pass of Attn_Net_Gated. Returns (A, x) like the PyTorch module.

    x: (N, L); wa/wb: (L, D); ba/bb: (D,); wc: (D, C); bc: (C,).
    """
    N, L = x.shape
    D = wa.shape[1]
    C = wc.shape[1]

    compute_dtype = jnp.dtype(compute_dtype)
    x_dtype = jnp.dtype(x.dtype)
    out_dtype = x_dtype
    if epilogue_dtype is None:
        # f32 compute path (tight-accuracy mode) keeps an f32 epilogue.
        epilogue_dtype = (jnp.dtype(jnp.float32) if compute_dtype == jnp.float32
                          else _auto_epilogue_dtype(compute_dtype))
    epilogue_dtype = jnp.dtype(epilogue_dtype)

    # Row tile: multiple of the input's sublane packing; clamped to the padded
    # bag size so small bags don't run dead rows, but kept large (default 1024)
    # so the ~0.35 us per-grid-step cost is amortised.
    sublane = 8 * max(1, 4 // x_dtype.itemsize)
    tile_n = max(sublane, (int(tile_n) // sublane) * sublane)
    n_ceil = ((N + sublane - 1) // sublane) * sublane
    tile_n = min(tile_n, n_ceil)

    def _vmem_need(tn):
        x_stream = 2 * tn * L * x_dtype.itemsize                     # x dbl-buf
        out_stream = 2 * tn * max(C, 128) * out_dtype.itemsize       # out dbl-buf
        w_res = 2 * (L * 2 * D * compute_dtype.itemsize              # Wa||Wb
                     + 2 * D * 4                                     # ba||bb
                     + D * max(C, 128) * 4 + 128 * 4)                # Wc, bc
        live = (tn * L * compute_dtype.itemsize                      # x cast
                + tn * 2 * D * 4                                     # z (f32)
                + 2 * tn * D * epilogue_dtype.itemsize               # a*b, gated
                + tn * D * 4)                                        # upcast prod
        return x_stream + out_stream + w_res + live

    # Auto-shrink the tile if the footprint would not fit under the cap.
    while tile_n > sublane and _vmem_need(tile_n) * 1.4 > _VMEM_CAP:
        tile_n = max(sublane, (tile_n // 2 // sublane) * sublane)

    n_tiles = pl.cdiv(N, tile_n)
    # Give v7x's two TensorCores something to do even for single-tile bags.
    if n_tiles == 1 and N > 2 * sublane:
        tile_n = (((N + 1) // 2 + sublane - 1) // sublane) * sublane
        n_tiles = pl.cdiv(N, tile_n)

    vmem_limit = int(min(max(_vmem_need(tile_n) * 1.4 + (4 << 20),
                             32 * 1024 * 1024), _VMEM_CAP))

    # Fused resident weights / biases (tiny one-time wrapper work).
    wab = jnp.concatenate([wa, wb], axis=1).astype(compute_dtype)    # (L, 2D)
    bab = jnp.concatenate([ba, bb]).reshape(1, 2 * D).astype(jnp.float32)
    bc2 = bc.reshape(1, C).astype(jnp.float32)

    if C == 1:
        wc_arg = wc.reshape(1, D).astype(epilogue_dtype)             # Wc^T row
        wc_spec = pl.BlockSpec((1, D), lambda i: (0, 0))
        kernel = _make_kernel(D, compute_dtype, epilogue_dtype, reduce_c1=True)
    else:
        wc_arg = wc.astype(compute_dtype)                            # (D, C)
        wc_spec = pl.BlockSpec((D, C), lambda i: (0, 0))
        kernel = _make_kernel(D, compute_dtype, epilogue_dtype, reduce_c1=False)

    A = pl.pallas_call(
        kernel,
        out_shape=jax.ShapeDtypeStruct((N, C), out_dtype),
        grid_spec=pltpu.PrefetchScalarGridSpec(
            num_scalar_prefetch=0,
            grid=(n_tiles,),
            in_specs=[
                pl.BlockSpec((tile_n, L), lambda i: (i, 0)),   # x rows (streamed, orig dtype)
                pl.BlockSpec((L, 2 * D), lambda i: (0, 0)),    # Wa||Wb (resident)
                pl.BlockSpec((1, 2 * D), lambda i: (0, 0)),    # ba||bb
                wc_spec,                                        # Wc (resident)
                pl.BlockSpec((1, C), lambda i: (0, 0)),        # bc
            ],
            out_specs=pl.BlockSpec((tile_n, C), lambda i: (i, 0)),
        ),
        compiler_params=pltpu.CompilerParams(
            dimension_semantics=("parallel",),
            vmem_limit_bytes=vmem_limit),
    )(x, wab, bab, wc_arg, bc2)

    # The module returns (A, x); x is a pure passthrough (no kernel needed).
    return A, x


def _reference(x, wa, ba, wb, bb, wc, bc):
    a = jnp.tanh(x @ wa + ba)
    b = jax.nn.sigmoid(x @ wb + bb)
    return (a * b) @ wc + bc


if __name__ == "__main__":
    # Small shapes consistent with the module (real model: L=1024, D=256, C=1).
    # N deliberately NOT a multiple of the row tile to exercise the masked
    # edge block (no wrapper padding).
    N, L, D = 300, 256, 128

    key = jax.random.PRNGKey(0)
    kx, kwa, kba, kwb, kbb, kwc, kbc, kwc3, kbc3 = jax.random.split(key, 9)

    x = jax.random.normal(kx, (N, L), dtype=jnp.float32)
    wa = jax.random.normal(kwa, (L, D), dtype=jnp.float32) * 0.05
    ba = jax.random.normal(kba, (D,), dtype=jnp.float32) * 0.05
    wb = jax.random.normal(kwb, (L, D), dtype=jnp.float32) * 0.05
    bb = jax.random.normal(kbb, (D,), dtype=jnp.float32) * 0.05
    wc = jax.random.normal(kwc, (D, 1), dtype=jnp.float32) * 0.05
    bc = jax.random.normal(kbc, (1,), dtype=jnp.float32) * 0.05

    ref = _reference(x, wa, ba, wb, bb, wc, bc)

    # (1) n_classes == 1, f32 compute + f32 epilogue: tight check.
    A32, x_out = attn_net_gated(x, wa, ba, wb, bb, wc, bc,
                                compute_dtype=jnp.float32)
    jax.block_until_ready(A32)
    jax.block_until_ready(x_out)
    assert A32.shape == (N, 1) and x_out.shape == (N, L)
    assert jnp.array_equal(x_out, x), "x passthrough mismatch"
    assert jnp.allclose(A32, ref, atol=1e-2, rtol=1e-2), "f32 kernel mismatch"

    # (2) n_classes == 1, bf16 MXU operands (+ bf16 epilogue on v6e/v7x):
    # production path, looser tolerance.
    Abf, _ = attn_net_gated(x, wa, ba, wb, bb, wc, bc,
                            compute_dtype=jnp.bfloat16)
    jax.block_until_ready(Abf)
    assert Abf.shape == (N, 1)
    assert jnp.allclose(Abf, ref, atol=1e-1, rtol=1e-1), "bf16 kernel mismatch"

    # (3) n_classes > 1 exercises the compact MXU tail path.
    C3 = 3
    wc3 = jax.random.normal(kwc3, (D, C3), dtype=jnp.float32) * 0.05
    bc3 = jax.random.normal(kbc3, (C3,), dtype=jnp.float32) * 0.05
    A3, _ = attn_net_gated(x, wa, ba, wb, bb, wc3, bc3,
                           compute_dtype=jnp.float32)
    jax.block_until_ready(A3)
    ref3 = _reference(x, wa, ba, wb, bb, wc3, bc3)
    assert A3.shape == (N, C3)
    assert jnp.allclose(A3, ref3, atol=1e-2, rtol=1e-2), "multi-class mismatch"

    print("KERNEL_OK")
</pallas_src>

<mosaic_0001>
module attributes {stable_mosaic.version = 11 : i64} {
  func.func @kernel(%arg0: i32, %arg1: memref<152x256xf32, #tpu.memory_space<vmem>>, %arg2: memref<256x256xf32, #tpu.memory_space<vmem>>, %arg3: memref<1x256xf32, #tpu.memory_space<vmem>>, %arg4: memref<1x128xf32, #tpu.memory_space<vmem>>, %arg5: memref<1x1xf32, #tpu.memory_space<vmem>>, %arg6: memref<152x1xf32, #tpu.memory_space<vmem>>) attributes {dimension_semantics = [#tpu.dimension_semantics<parallel>], iteration_bounds = array<i64: 2>, scalar_prefetch = 0 : i64, scratch_operands = 0 : i64, tpu.core_type = #tpu.core_type<tc>, window_params = [{transform_indices = @transform_0, window_bounds = array<i64: 152, 256>}, {pipeline_mode = #tpu.pipeline_mode<synchronous>, transform_indices = @transform_1, window_bounds = array<i64: 256, 256>}, {pipeline_mode = #tpu.pipeline_mode<synchronous>, transform_indices = @transform_2, window_bounds = array<i64: 1, 256>}, {pipeline_mode = #tpu.pipeline_mode<synchronous>, transform_indices = @transform_3, window_bounds = array<i64: 1, 128>}, {pipeline_mode = #tpu.pipeline_mode<synchronous>, transform_indices = @transform_4, window_bounds = array<i64: 1, 1>}, {transform_indices = @transform_5, window_bounds = array<i64: 152, 1>}]} {
    %c0 = arith.constant 0 : index
    %c0_0 = arith.constant 0 : index
    %0 = vector.load %arg1[%c0, %c0_0] : memref<152x256xf32, #tpu.memory_space<vmem>>, vector<152x256xf32>
    %c0_1 = arith.constant 0 : index
    %c0_2 = arith.constant 0 : index
    %1 = vector.load %arg2[%c0_1, %c0_2] : memref<256x256xf32, #tpu.memory_space<vmem>>, vector<256x256xf32>
    %cst = arith.constant dense<0.000000e+00> : vector<152x256xf32>
    %2 = tpu.matmul %0, %1, %cst {dimension_numbers = #tpu.dot_dimension_numbers<[1], [0], [0], [1], [0, 0, 1, 1], [], []>} : vector<152x256xf32>, vector<256x256xf32>, vector<152x256xf32> -> vector<152x256xf32>
    %c0_3 = arith.constant 0 : index
    %c0_4 = arith.constant 0 : index
    %3 = vector.load %arg3[%c0_3, %c0_4] : memref<1x256xf32, #tpu.memory_space<vmem>>, vector<1x256xf32>
    %4 = vector.broadcast %3 : vector<1x256xf32> to vector<152x256xf32>
    %5 = arith.addf %2, %4 : vector<152x256xf32>
    %6 = vector.extract_strided_slice %5 {offsets = [0, 0], sizes = [152, 128], strides = [1, 1]} : vector<152x256xf32> to vector<152x128xf32>
    %7 = math.tanh %6 : vector<152x128xf32>
    %8 = vector.extract_strided_slice %5 {offsets = [0, 128], sizes = [152, 128], strides = [1, 1]} : vector<152x256xf32> to vector<152x128xf32>
    %9 = arith.negf %8 : vector<152x128xf32>
    %10 = math.exp %9 : vector<152x128xf32>
    %cst_5 = arith.constant 1.000000e+00 : f32
    %11 = vector.broadcast %cst_5 : f32 to vector<152x128xf32>
    %12 = arith.addf %11, %10 : vector<152x128xf32>
    %13 = arith.divf %11, %12 : vector<152x128xf32>
    %14 = arith.mulf %7, %13 : vector<152x128xf32>
    %c0_6 = arith.constant 0 : index
    %c0_7 = arith.constant 0 : index
    %15 = vector.load %arg4[%c0_6, %c0_7] : memref<1x128xf32, #tpu.memory_space<vmem>>, vector<1x128xf32>
    %16 = vector.broadcast %15 : vector<1x128xf32> to vector<152x128xf32>
    %17 = arith.mulf %14, %16 : vector<152x128xf32>
    %cst_8 = arith.constant dense<0.000000e+00> : vector<152xf32>
    %18 = vector.multi_reduction <add>, %17, %cst_8 [1] : vector<152x128xf32> to vector<152xf32>
    %19 = vector.shape_cast %18 : vector<152xf32> to vector<152x1xf32>
    %c0_9 = arith.constant 0 : index
    %c0_10 = arith.constant 0 : index
    %20 = vector.load %arg5[%c0_9, %c0_10] : memref<1x1xf32, #tpu.memory_space<vmem>>, vector<1x1xf32>
    %21 = vector.broadcast %20 : vector<1x1xf32> to vector<152x1xf32>
    %22 = arith.addf %19, %21 : vector<152x1xf32>
    %c0_11 = arith.constant 0 : index
    %c0_12 = arith.constant 0 : index
    %23 = vector.load %arg6[%c0_11, %c0_12] : memref<152x1xf32, #tpu.memory_space<vmem>>, vector<152x1xf32>
    tpu.vector_store %arg6[%c0_11, %c0_12], %22 {strides = array<i32>} : memref<152x1xf32, #tpu.memory_space<vmem>>, vector<152x1xf32>,
    return
  }
  func.func @transform_0(%arg0: i32) -> (i32, i32) {
    %c0_i32 = arith.constant 0 : i32
    %c0_i32_0 = arith.constant 0 : i32
    return %arg0, %c0_i32 : i32, i32
  }
  func.func @transform_1(%arg0: i32) -> (i32, i32) {
    %c0_i32 = arith.constant 0 : i32
    %c0_i32_0 = arith.constant 0 : i32
    %c0_i32_1 = arith.constant 0 : i32
    return %c0_i32, %c0_i32_0 : i32, i32
  }
  func.func @transform_2(%arg0: i32) -> (i32, i32) {
    %c0_i32 = arith.constant 0 : i32
    %c0_i32_0 = arith.constant 0 : i32
    %c0_i32_1 = arith.constant 0 : i32
    return %c0_i32, %c0_i32_0 : i32, i32
  }
  func.func @transform_3(%arg0: i32) -> (i32, i32) {
    %c0_i32 = arith.constant 0 : i32
    %c0_i32_0 = arith.constant 0 : i32
    %c0_i32_1 = arith.constant 0 : i32
    return %c0_i32, %c0_i32_0 : i32, i32
  }
  func.func @transform_4(%arg0: i32) -> (i32, i32) {
    %c0_i32 = arith.constant 0 : i32
    %c0_i32_0 = arith.constant 0 : i32
    %c0_i32_1 = arith.constant 0 : i32
    return %c0_i32, %c0_i32_0 : i32, i32
  }
  func.func @transform_5(%arg0: i32) -> (i32, i32) {
    %c0_i32 = arith.constant 0 : i32
    %c0_i32_0 = arith.constant 0 : i32
    return %arg0, %c0_i32 : i32, i32
  }
}

</mosaic_0001>

<llo_original>
// kernel: tpu_custom_call.1
$region0: #{tpu_custom_call.1}
  #allocation0 [shape = 'u32[]', space=smem, size = 0x4, offset = 0x4, fixed_abs, tag = 'smem constant byte address 0x4 - core index']
  #allocation1 [shape = 'u32[144,128]{1,0:T(1,128)}', space=vmem, size = 0x12000, scoped, tag = 'internal scratch']
  #allocation2 [shape = 'f32[1,1]{1,0:T(1,128)S(1)}', space=vmem, size = 0x200, scoped, tag = 'scoped memory for tpu_custom_call.1']
  %s0 = inlined_call_operand.hbm [shape: f32[300,256], index: 0, kind: input, shape index: {}]
  %s1 = inlined_call_operand.hbm [shape: f32[256,256], index: 1, kind: input, shape index: {}]
  %s2 = inlined_call_operand.vmem [shape: f32[1,256], index: 2, kind: input, shape index: {}]
  %s3 = inlined_call_operand.vmem [shape: f32[1,128], index: 3, kind: input, shape index: {}]
  %s4 = inlined_call_operand.<no memory space> [shape: f32[1,1], index: 4, kind: input, shape index: {}]
  %s5 = inlined_call_operand.vmem [shape: f32[300,1], index: 5, kind: output, shape index: {}]
  %s6 = sld [smem:[#allocation0]]
  $region61: #{tpu_custom_call.1} parent=0
    _
  %s8 = ssub.s32 1, %s6
  %s9 = scalar_select 0, %s8, %s6
  %v10 = vstv %s4
  %11 = vst [vmem:[#allocation2] sm:$0x1] %v10
  $region1: #{tpu_custom_call.1} parent=0
    #allocation3 [shape = 'u8[311296]{0}', space=vmem, size = 0x4c000, scoped, tag = 'input window, operand 0']
    #allocation4 [shape = 's32[2]{0}', space=sflag, size = 0x8, scoped, tag = 'scoped memory for tpu_custom_call.1']
    #allocation5 [shape = 'u8[262144]{0}', space=vmem, size = 0x40000, scoped, tag = 'input window, operand 1, single buffered']
    #allocation6 [shape = 's32[1]{0}', space=sflag, size = 0x4, scoped, tag = 'scoped memory for tpu_custom_call.1']
    %12 = vsyncpa [#allocation4], 0
    %s13 = scalar_lea.sflag [#allocation4], 1
    %14 = vsyncpa %s13, 0
    %15 = vsyncpa [#allocation6], 0
    loop: start=0, step=1, limit=4
    $region2: #{tpu_custom_call.1} parent=1 // loop_pre_header
      _
    $region3: #{tpu_custom_call.1} parent=1 // loop_header
      %s17 = sphi 0, %s21
      %p18 = scmp.ge.s32.totalorder %s17, 4
      %s27 = sphi 0, %s29
      %s30 = sphi 0, %s27
      %s31 = sphi 0, %s30
      %s47 = sphi 0, %s31
      %s51 = sphi 0, %s51
      %s53 = sphi 0, %s51
      %s54 = sphi 0, %s53
      %s68 = sphi 0, %s54
      %s72 = sphi 0, %s72
      %s74 = sphi 0, %s72
      %s75 = sphi 0, %s74
      %s89 = sphi 0, %s75
      %s93 = sphi 0, %s93
      %s95 = sphi 0, %s93
      %s96 = sphi 0, %s95
      %s110 = sphi 0, %s96
      %s114 = sphi 0, %s114
      %s116 = sphi 0, %s114
      %s117 = sphi 0, %s116
      %s131 = sphi 0, %s117
      %s137 = sphi 0, %s139
      %s140 = sphi 0, %s137
      %s141 = sphi 0, %s140
      %s157 = sphi 0, %s141
    $region4: #{tpu_custom_call.1} parent=1 // loop_header_branch
      %20 = sbr.rel (%p18) target = $region8
    $region5: #{tpu_custom_call.1} parent=1 // loop_body
      %s22 = ssub.s32 %s17, 1
      %s23 = ssub.s32 %s17, 2
      %s24 = sadd.s32 %s17, 1
      %s25 = ssub.s32 %s17, %s24
      %p26 = scmp.eq.s32.totalorder %s25, 0
      %s28 = sadd.s32 %s27, 1
      %s29 = scalar_select %p26, %s27, %s28
      %p32 = pneg %p26
      %p33 = scmp.eq.s32.totalorder %s17, 1
      %p34 = por %p32, %p33
      %p35 = scmp.ne.s32.totalorder %s27, %s30
      %p36 = scmp.eq.s32.totalorder %s17, 0
      %p37 = por %p35, %p36
      %p38 = scmp.ne.s32.totalorder %s27, %s30
      %p39 = scmp.eq.s32.totalorder %s22, 1
      %p40 = por %p38, %p39
      %p41 = scmp.ne.s32.totalorder %s30, %s31
      %p42 = scmp.eq.s32.totalorder %s22, 0
      %p43 = por %p41, %p42
      %p44 = scmp.ne.s32.totalorder %s30, %s31
      %p45 = scmp.eq.s32.totalorder %s23, 1
      %p46 = por %p44, %p45
      %p48 = scmp.ne.s32.totalorder %s31, %s47
      %p49 = scmp.eq.s32.totalorder %s23, 0
      %p50 = por %p48, %p49
      %s52 = sadd.s32 %s51, 1
      %p55 = scmp.eq.s32.totalorder %s17, 1
      %p56 = scmp.ne.s32.totalorder %s51, %s53
      %p57 = scmp.eq.s32.totalorder %s17, 0
      %p58 = por %p56, %p57
      %p59 = scmp.ne.s32.totalorder %s51, %s53
      %p60 = scmp.eq.s32.totalorder %s22, 1
      %p61 = por %p59, %p60
      %p62 = scmp.ne.s32.totalorder %s53, %s54
      %p63 = scmp.eq.s32.totalorder %s22, 0
      %p64 = por %p62, %p63
      %p65 = scmp.ne.s32.totalorder %s53, %s54
      %p66 = scmp.eq.s32.totalorder %s23, 1
      %p67 = por %p65, %p66
      %p69 = scmp.ne.s32.totalorder %s54, %s68
      %p70 = scmp.eq.s32.totalorder %s23, 0
      %p71 = por %p69, %p70
      %s73 = sadd.s32 %s72, 1
      %p76 = scmp.eq.s32.totalorder %s17, 1
      %p77 = scmp.ne.s32.totalorder %s72, %s74
      %p78 = scmp.eq.s32.totalorder %s17, 0
      %p79 = por %p77, %p78
      %p80 = scmp.ne.s32.totalorder %s72, %s74
      %p81 = scmp.eq.s32.totalorder %s22, 1
      %p82 = por %p80, %p81
      %p83 = scmp.ne.s32.totalorder %s74, %s75
      %p84 = scmp.eq.s32.totalorder %s22, 0
      %p85 = por %p83, %p84
      %p86 = scmp.ne.s32.totalorder %s74, %s75
      %p87 = scmp.eq.s32.totalorder %s23, 1
      %p88 = por %p86, %p87
      %p90 = scmp.ne.s32.totalorder %s75, %s89
      %p91 = scmp.eq.s32.totalorder %s23, 0
      %p92 = por %p90, %p91
      %s94 = sadd.s32 %s93, 1
      %p97 = scmp.eq.s32.totalorder %s17, 1
      %p98 = scmp.ne.s32.totalorder %s93, %s95
      %p99 = scmp.eq.s32.totalorder %s17, 0
      %p100 = por %p98, %p99
      %p101 = scmp.ne.s32.totalorder %s93, %s95
      %p102 = scmp.eq.s32.totalorder %s22, 1
      %p103 = por %p101, %p102
      %p104 = scmp.ne.s32.totalorder %s95, %s96
      %p105 = scmp.eq.s32.totalorder %s22, 0
      %p106 = por %p104, %p105
      %p107 = scmp.ne.s32.totalorder %s95, %s96
      %p108 = scmp.eq.s32.totalorder %s23, 1
      %p109 = por %p107, %p108
      %p111 = scmp.ne.s32.totalorder %s96, %s110
      %p112 = scmp.eq.s32.totalorder %s23, 0
      %p113 = por %p111, %p112
      %s115 = sadd.s32 %s114, 1
      %p118 = scmp.eq.s32.totalorder %s17, 1
      %p119 = scmp.ne.s32.totalorder %s114, %s116
      %p120 = scmp.eq.s32.totalorder %s17, 0
      %p121 = por %p119, %p120
      %p122 = scmp.ne.s32.totalorder %s114, %s116
      %p123 = scmp.eq.s32.totalorder %s22, 1
      %p124 = por %p122, %p123
      %p125 = scmp.ne.s32.totalorder %s116, %s117
      %p126 = scmp.eq.s32.totalorder %s22, 0
      %p127 = por %p125, %p126
      %p128 = scmp.ne.s32.totalorder %s116, %s117
      %p129 = scmp.eq.s32.totalorder %s23, 1
      %p130 = por %p128, %p129
      %p132 = scmp.ne.s32.totalorder %s117, %s131
      %p133 = scmp.eq.s32.totalorder %s23, 0
      %p134 = por %p132, %p133
      %s135 = ssub.s32 %s17, %s24
      %p136 = scmp.eq.s32.totalorder %s135, 0
      %s138 = sadd.s32 %s137, 1
      %s139 = scalar_select %p136, %s137, %s138
      %p142 = pneg %p136
      %p143 = scmp.eq.s32.totalorder %s17, 1
      %p144 = por %p142, %p143
      %p145 = scmp.ne.s32.totalorder %s137, %s140
      %p146 = scmp.eq.s32.totalorder %s17, 0
      %p147 = por %p145, %p146
      %p148 = scmp.ne.s32.totalorder %s137, %s140
      %p149 = scmp.eq.s32.totalorder %s22, 1
      %p150 = por %p148, %p149
      %p151 = scmp.ne.s32.totalorder %s140, %s141
      %p152 = scmp.eq.s32.totalorder %s22, 0
      %p153 = por %p151, %p152
      %p154 = scmp.ne.s32.totalorder %s140, %s141
      %p155 = scmp.eq.s32.totalorder %s23, 1
      %p156 = por %p154, %p155
      %p158 = scmp.ne.s32.totalorder %s141, %s157
      %p159 = scmp.eq.s32.totalorder %s23, 0
      %p160 = por %p158, %p159
      %p161 = scmp.le.s32.totalorder 1, %s17
      %p162 = scmp.lt.s32.totalorder %s17, 3
      %p163 = pnand %p161, %p162
      %p164 = pneg %p163
      // Predicated region
      $region9: #{tpu_custom_call.1} parent=5 // pred_check
        _
      $region10: #{tpu_custom_call.1} parent=5 // pred_check_branch
        %166 = sbr.rel (%p163) target = $region12
      $region11: #{tpu_custom_call.1} parent=5 // pred_region
        %s167 = ssub.s32 %s17, 1
        // Predicated region
        $region13: #{tpu_custom_call.1} parent=11 // pred_check
          %p168 = pneg %p64
        $region14: #{tpu_custom_call.1} parent=11 // pred_check_branch
          %170 = sbr.rel (%p168) target = $region16
        $region15: #{tpu_custom_call.1} parent=11 // pred_region
          %s172 = ssub.s32 8192, 8192
          %173 = vsyncadd [#allocation6], %s172
          %s174 = sshll.u32 [#allocation5], 4
          %s175 = int_to_ptr.vmem [resolvable:$true] %s174
          %180 = dma.hbm_to_vmem [thread:$0]  %s1, 8192, %s175, [#allocation6], 256, 256, 16
        $region16: #{tpu_custom_call.1} parent=11 // pred_fallthru
          _
        // Predicated region
        $region17: #{tpu_custom_call.1} parent=11 // pred_check
          %p181 = pneg %p85
        $region18: #{tpu_custom_call.1} parent=11 // pred_check_branch
          %183 = sbr.rel (%p181) target = $region20
        $region19: #{tpu_custom_call.1} parent=11 // pred_region
          _
        $region20: #{tpu_custom_call.1} parent=11 // pred_fallthru
          _
        // Predicated region
        $region21: #{tpu_custom_call.1} parent=11 // pred_check
          %p184 = pneg %p106
        $region22: #{tpu_custom_call.1} parent=11 // pred_check_branch
          %186 = sbr.rel (%p184) target = $region24
        $region23: #{tpu_custom_call.1} parent=11 // pred_region
          _
        $region24: #{tpu_custom_call.1} parent=11 // pred_fallthru
          _
        // Predicated region
        $region25: #{tpu_custom_call.1} parent=11 // pred_check
          %p187 = pneg %p127
        $region26: #{tpu_custom_call.1} parent=11 // pred_check_branch
          %189 = sbr.rel (%p187) target = $region28
        $region27: #{tpu_custom_call.1} parent=11 // pred_region
          _
        $region28: #{tpu_custom_call.1} parent=11 // pred_fallthru
          _
      $region12: #{tpu_custom_call.1} parent=5 // pred_fallthru
        _
      %p190 = scmp.lt.s32.totalorder %s17, 2
      // Predicated region
      $region29: #{tpu_custom_call.1} parent=5 // pred_check
        %p191 = pneg %p190
      $region30: #{tpu_custom_call.1} parent=5 // pred_check_branch
        %193 = sbr.rel (%p191) target = $region32
      $region31: #{tpu_custom_call.1} parent=5 // pred_region
        // Predicated region
        $region33: #{tpu_custom_call.1} parent=31 // pred_check
          %p194 = pneg %p37
        $region34: #{tpu_custom_call.1} parent=31 // pred_check_branch
          %196 = sbr.rel (%p194) target = $region36
        $region35: #{tpu_custom_call.1} parent=31 // pred_region
          %s197 = sand.u32 %s27, 1
          %s198 = scalar_lea.sflag [#allocation4], %s197
          %s199 = sand.u32 %s27, 1
          %s200 = smul.addr %s199, 304
          %s201 = scalar_lea.vmem [#allocation3], %s200
          %s202 = smul.u32 19, %s17
          %s204 = ssub.s32 4864, 4864
          %205 = vsyncadd %s198, %s204
          %s206 = smul.addr %s202, 2
          %s207 = smul.addr %s206, 128
          %s208 = scalar_lea.hbm %s0, %s207
          %s209 = sshll.u32 %s201, 4
          %s210 = int_to_ptr.vmem [resolvable:$true] %s209
          %215 = dma.hbm_to_vmem [thread:$0]  %s208, 4864, %s210, %s198, 256, 256, 16
        $region36: #{tpu_custom_call.1} parent=31 // pred_fallthru
          _
      $region32: #{tpu_custom_call.1} parent=5 // pred_fallthru
        _
      %p216 = scmp.le.s32.totalorder 1, %s17
      %p217 = scmp.lt.s32.totalorder %s17, 3
      %p218 = pnand %p216, %p217
      %p219 = pneg %p218
      // Predicated region
      $region37: #{tpu_custom_call.1} parent=5 // pred_check
        _
      $region38: #{tpu_custom_call.1} parent=5 // pred_check_branch
        %221 = sbr.rel (%p218) target = $region40
      $region39: #{tpu_custom_call.1} parent=5 // pred_region
        %s222 = ssub.s32 %s17, 1
        %s223 = sand.u32 %s30, 1
        %s224 = scalar_lea.sflag [#allocation4], %s223
        %s225 = sand.u32 %s30, 1
        %s226 = smul.addr %s225, 304
        %s227 = scalar_lea.vmem [#allocation3], %s226
        // Predicated region
        $region41: #{tpu_custom_call.1} parent=39 // pred_check
          %p228 = pneg %p43
        $region42: #{tpu_custom_call.1} parent=39 // pred_check_branch
          %230 = sbr.rel (%p228) target = $region44
        $region43: #{tpu_custom_call.1} parent=39 // pred_region
          %231 = dma.done %s224, 4864
        $region44: #{tpu_custom_call.1} parent=39 // pred_fallthru
          _
        // Predicated region
        $region45: #{tpu_custom_call.1} parent=39 // pred_check
          %p232 = pneg %p64
        $region46: #{tpu_custom_call.1} parent=39 // pred_check_branch
          %234 = sbr.rel (%p232) target = $region48
        $region47: #{tpu_custom_call.1} parent=39 // pred_region
          %235 = dma.done [#allocation6], 8192
        $region48: #{tpu_custom_call.1} parent=39 // pred_fallthru
          _
        %s236 = sand.u32 %s30, 1
        %s237 = scalar_lea.sflag [#allocation4], %s236
        %s238 = sand.u32 %s30, 1
        %s239 = smul.addr %s238, 304
        %s240 = scalar_lea.vmem [#allocation3], %s239
        %p241 = pneg %p43
        %p242 = pneg %p40
        %p243 = pneg %p64
        %p244 = pneg %p61
        %p245 = pneg %p85
        %p246 = pneg %p82
        %p247 = pneg %p106
        %p248 = pneg %p103
        %p249 = pneg %p127
        %p250 = pneg %p124
        %p251 = pneg %p153
        %p252 = pneg %p150
        %s253 = smul.u32 19, %s22
        %p254 = scmp.lt.s32.totalorder %s253, 37
        %s255 = scalar_select %p254, %s253, 37
        %s256 = smul.addr %s255, 8
        %s257 = scalar_lea.vmem %s5, %s256
        %s258 = smul.u32 19, %s22
        %s259 = smul.u32 19, %s22
        %p260 = scmp.lt.s32.totalorder %s259, 37
        %s261 = scalar_select %p260, %s259, 37
        %s262 = smul.addr %s261, 8
        %s263 = scalar_lea.vmem %s5, %s262
        %s264 = smul.u32 19, %s22
        %v265 = vld [vmem:[%s227] sm:$0xff]
        %v266 = vld [vmem:[%s227 + $0x8] sm:$0xff]
        %v267 = vld [vmem:[%s227 + $0x10] sm:$0xff]
        %v268 = vld [vmem:[%s227 + $0x18] sm:$0xff]
        %v269 = vld [vmem:[%s227 + $0x20] sm:$0xff]
        %v270 = vld [vmem:[%s227 + $0x28] sm:$0xff]
        %v271 = vld [vmem:[%s227 + $0x30] sm:$0xff]
        %v272 = vld [vmem:[%s227 + $0x38] sm:$0xff]
        %v273 = vld [vmem:[%s227 + $0x40] sm:$0xff]
        %v274 = vld [vmem:[%s227 + $0x48] sm:$0xff]
        %v275 = vld [vmem:[%s227 + $0x50] sm:$0xff]
        %v276 = vld [vmem:[%s227 + $0x58] sm:$0xff]
        %v277 = vld [vmem:[%s227 + $0x60] sm:$0xff]
        %v278 = vld [vmem:[%s227 + $0x68] sm:$0xff]
        %v279 = vld [vmem:[%s227 + $0x70] sm:$0xff]
        %v280 = vld [vmem:[%s227 + $0x78] sm:$0xff]
        %v281 = vld [vmem:[%s227 + $0x80] sm:$0xff]
        %v282 = vld [vmem:[%s227 + $0x88] sm:$0xff]
        %v283 = vld [vmem:[%s227 + $0x90] sm:$0xff]
        %v284 = vld [vmem:[%s227 + $0x98] sm:$0xff]
        %v285 = vld [vmem:[%s227 + $0xa0] sm:$0xff]
        %v286 = vld [vmem:[%s227 + $0xa8] sm:$0xff]
        %v287 = vld [vmem:[%s227 + $0xb0] sm:$0xff]
        %v288 = vld [vmem:[%s227 + $0xb8] sm:$0xff]
        %v289 = vld [vmem:[%s227 + $0xc0] sm:$0xff]
        %v290 = vld [vmem:[%s227 + $0xc8] sm:$0xff]
        %v291 = vld [vmem:[%s227 + $0xd0] sm:$0xff]
        %v292 = vld [vmem:[%s227 + $0xd8] sm:$0xff]
        %v293 = vld [vmem:[%s227 + $0xe0] sm:$0xff]
        %v294 = vld [vmem:[%s227 + $0xe8] sm:$0xff]
        %v295 = vld [vmem:[%s227 + $0xf0] sm:$0xff]
        %v296 = vld [vmem:[%s227 + $0xf8] sm:$0xff]
        %v297 = vld [vmem:[%s227 + $0x100] sm:$0xff]
        %v298 = vld [vmem:[%s227 + $0x108] sm:$0xff]
        %v299 = vld [vmem:[%s227 + $0x110] sm:$0xff]
        %v300 = vld [vmem:[%s227 + $0x118] sm:$0xff]
        %v301 = vld [vmem:[%s227 + $0x120] sm:$0xff]
        %v302 = vld [vmem:[%s227 + $0x128] sm:$0xff]
        %v303 = vld [vmem:[#allocation5] sm:$0xff]
        %v304 = vld [vmem:[#allocation5 + $0x8] sm:$0xff]
        %v305 = vld [vmem:[#allocation5 + $0x10] sm:$0xff]
        %v306 = vld [vmem:[#allocation5 + $0x18] sm:$0xff]
        %v307 = vld [vmem:[#allocation5 + $0x20] sm:$0xff]
        %v308 = vld [vmem:[#allocation5 + $0x28] sm:$0xff]
        %v309 = vld [vmem:[#allocation5 + $0x30] sm:$0xff]
        %v310 = vld [vmem:[#allocation5 + $0x38] sm:$0xff]
        %v311 = vld [vmem:[#allocation5 + $0x40] sm:$0xff]
        %v312 = vld [vmem:[#allocation5 + $0x48] sm:$0xff]
        %v313 = vld [vmem:[#allocation5 + $0x50] sm:$0xff]
        %v314 = vld [vmem:[#allocation5 + $0x58] sm:$0xff]
        %v315 = vld [vmem:[#allocation5 + $0x60] sm:$0xff]
        %v316 = vld [vmem:[#allocation5 + $0x68] sm:$0xff]
        %v317 = vld [vmem:[#allocation5 + $0x70] sm:$0xff]
        %v318 = vld [vmem:[#allocation5 + $0x78] sm:$0xff]
        %v319 = vld [vmem:[#allocation5 + $0x80] sm:$0xff]
        %v320 = vld [vmem:[#allocation5 + $0x88] sm:$0xff]
        %v321 = vld [vmem:[#allocation5 + $0x90] sm:$0xff]
        %v322 = vld [vmem:[#allocation5 + $0x98] sm:$0xff]
        %v323 = vld [vmem:[#allocation5 + $0xa0] sm:$0xff]
        %v324 = vld [vmem:[#allocation5 + $0xa8] sm:$0xff]
        %v325 = vld [vmem:[#allocation5 + $0xb0] sm:$0xff]
        %v326 = vld [vmem:[#allocation5 + $0xb8] sm:$0xff]
        %v327 = vld [vmem:[#allocation5 + $0xc0] sm:$0xff]
        %v328 = vld [vmem:[#allocation5 + $0xc8] sm:$0xff]
        %v329 = vld [vmem:[#allocation5 + $0xd0] sm:$0xff]
        %v330 = vld [vmem:[#allocation5 + $0xd8] sm:$0xff]
        %v331 = vld [vmem:[#allocation5 + $0xe0] sm:$0xff]
        %v332 = vld [vmem:[#allocation5 + $0xe8] sm:$0xff]
        %v333 = vld [vmem:[#allocation5 + $0xf0] sm:$0xff]
        %v334 = vld [vmem:[#allocation5 + $0xf8] sm:$0xff]
        %v335 = vld [vmem:[#allocation5 + $0x100] sm:$0xff]
        %v336 = vld [vmem:[#allocation5 + $0x108] sm:$0xff]
        %v337 = vld [vmem:[#allocation5 + $0x110] sm:$0xff]
        %v338 = vld [vmem:[#allocation5 + $0x118] sm:$0xff]
        %v339 = vld [vmem:[#allocation5 + $0x120] sm:$0xff]
        %v340 = vld [vmem:[#allocation5 + $0x128] sm:$0xff]
        %v341 = vld [vmem:[#allocation5 + $0x130] sm:$0xff]
        %v342 = vld [vmem:[#allocation5 + $0x138] sm:$0xff]
        %v343 = vld [vmem:[#allocation5 + $0x140] sm:$0xff]
        %v344 = vld [vmem:[#allocation5 + $0x148] sm:$0xff]
        %v345 = vld [vmem:[#allocation5 + $0x150] sm:$0xff]
        %v346 = vld [vmem:[#allocation5 + $0x158] sm:$0xff]
        %v347 = vld [vmem:[#allocation5 + $0x160] sm:$0xff]
        %v348 = vld [vmem:[#allocation5 + $0x168] sm:$0xff]
        %v349 = vld [vmem:[#allocation5 + $0x170] sm:$0xff]
        %v350 = vld [vmem:[#allocation5 + $0x178] sm:$0xff]
        %v351 = vld [vmem:[#allocation5 + $0x180] sm:$0xff]
        %v352 = vld [vmem:[#allocation5 + $0x188] sm:$0xff]
        %v353 = vld [vmem:[#allocation5 + $0x190] sm:$0xff]
        %v354 = vld [vmem:[#allocation5 + $0x198] sm:$0xff]
        %v355 = vld [vmem:[#allocation5 + $0x1a0] sm:$0xff]
        %v356 = vld [vmem:[#allocation5 + $0x1a8] sm:$0xff]
        %v357 = vld [vmem:[#allocation5 + $0x1b0] sm:$0xff]
        %v358 = vld [vmem:[#allocation5 + $0x1b8] sm:$0xff]
        %v359 = vld [vmem:[#allocation5 + $0x1c0] sm:$0xff]
        %v360 = vld [vmem:[#allocation5 + $0x1c8] sm:$0xff]
        %v361 = vld [vmem:[#allocation5 + $0x1d0] sm:$0xff]
        %v362 = vld [vmem:[#allocation5 + $0x1d8] sm:$0xff]
        %v363 = vld [vmem:[#allocation5 + $0x1e0] sm:$0xff]
        %v364 = vld [vmem:[#allocation5 + $0x1e8] sm:$0xff]
        %v365 = vld [vmem:[#allocation5 + $0x1f0] sm:$0xff]
        %v366 = vld [vmem:[#allocation5 + $0x1f8] sm:$0xff]
        %v367 = vld [vmem:[%s2] sm:$0x3]
        %v369 = vlaneseq
        %v370 = vshrl.u32 %v369, 7
        %v371 = vsub.s32 0, %v370
        %v372 = vrot.slane %v367, %v371
        %v373 = vlaneseq
        %v374 = vshrl.u32 %v373, 7
        %v375 = vsub.s32 1, %v374
        %v376 = vrot.slane %v367, %v375
        %379 = vmatprep.subr.mxu0 %v304
        %380 = vmatpush1.msra.mxu0 %v303
        %381 = vmatprep.subr.mxu0 %v306
        %382 = vmatpush1.msra.mxu0 %v305
        %383 = vmatprep.subr.mxu0 %v308
        %384 = vmatpush1.msra.mxu0 %v307
        %385 = vmatprep.subr.mxu0 %v310
        %386 = vmatpush1.msra.mxu0 %v309
        %387 = vmatprep.subr.mxu0 %v312
        %388 = vmatpush1.msra.mxu0 %v311
        %389 = vmatprep.subr.mxu0 %v314
        %390 = vmatpush1.msra.mxu0 %v313
        %391 = vmatprep.subr.mxu0 %v316
        %392 = vmatpush1.msra.mxu0 %v315
        %393 = vmatprep.subr.mxu0 %v318
        %394 = vmatpush1.msra.mxu0 %v317
        %395 = vmatprep.subr.mxu0 %v320
        %396 = vmatpush1.msra.mxu0 %v319
        %397 = vmatprep.subr.mxu0 %v322
        %398 = vmatpush1.msra.mxu0 %v321
        %399 = vmatprep.subr.mxu0 %v324
        %400 = vmatpush1.msra.mxu0 %v323
        %401 = vmatprep.subr.mxu0 %v326
        %402 = vmatpush1.msra.mxu0 %v325
        %403 = vmatprep.subr.mxu0 %v328
        %404 = vmatpush1.msra.mxu0 %v327
        %405 = vmatprep.subr.mxu0 %v330
        %406 = vmatpush1.msra.mxu0 %v329
        %407 = vmatprep.subr.mxu0 %v332
        %408 = vmatpush1.msra.mxu0 %v331
        %409 = vmatprep.subr.mxu0 %v334
        %410 = vmatpush1.msra.mxu0 %v333
        %411 = vmatprep.subr.mxu0 %v336
        %412 = vmatpush1.msra.mxu0 %v335
        %413 = vmatprep.subr.mxu0 %v338
        %414 = vmatpush1.msra.mxu0 %v337
        %415 = vmatprep.subr.mxu0 %v340
        %416 = vmatpush1.msra.mxu0 %v339
        %417 = vmatprep.subr.mxu0 %v342
        %418 = vmatpush1.msra.mxu0 %v341
        %419 = vmatprep.subr.mxu0 %v344
        %420 = vmatpush1.msra.mxu0 %v343
        %421 = vmatprep.subr.mxu0 %v346
        %422 = vmatpush1.msra.mxu0 %v345
        %423 = vmatprep.subr.mxu0 %v348
        %424 = vmatpush1.msra.mxu0 %v347
        %425 = vmatprep.subr.mxu0 %v350
        %426 = vmatpush1.msra.mxu0 %v349
        %427 = vmatprep.subr.mxu0 %v352
        %428 = vmatpush1.msra.mxu0 %v351
        %429 = vmatprep.subr.mxu0 %v354
        %430 = vmatpush1.msra.mxu0 %v353
        %431 = vmatprep.subr.mxu0 %v356
        %432 = vmatpush1.msra.mxu0 %v355
        %433 = vmatprep.subr.mxu0 %v358
        %434 = vmatpush1.msra.mxu0 %v357
        %435 = vmatprep.subr.mxu0 %v360
        %436 = vmatpush1.msra.mxu0 %v359
        %437 = vmatprep.subr.mxu0 %v362
        %438 = vmatpush1.msra.mxu0 %v361
        %439 = vmatprep.subr.mxu0 %v364
        %440 = vmatpush1.msra.mxu0 %v363
        %441 = vmatprep.subr.mxu0 %v366
        %442 = vmatpush1.msra.mxu0 %v365
        %443 = vmatprep.mubr.f32.mxu0 %v266
        %444 = vmatmul.mubr.f32.gmra.mrb[0].mxu0 %v265
        %v445 = vpop.f32.mrb[0].mxu0
        %v446 = vadd.f32 %v372, %v445
        %v447 = vpop.f32.mrb[0].mxu0
        %v448 = vadd.f32 %v376, %v447
        %449 = vmatprep.mubr.f32.mxu0 %v268
        %450 = vmatmul.mubr.f32.gmra.mrb[0].mxu0 %v267
        %v451 = vpop.f32.mrb[0].mxu0
        %v452 = vadd.f32 %v372, %v451
        %v453 = vpop.f32.mrb[0].mxu0
        %v454 = vadd.f32 %v376, %v453
        %455 = vmatprep.mubr.f32.mxu0 %v270
        %456 = vmatmul.mubr.f32.gmra.mrb[0].mxu0 %v269
        %v457 = vpop.f32.mrb[0].mxu0
        %v458 = vadd.f32 %v372, %v457
        %v459 = vpop.f32.mrb[0].mxu0
        %v460 = vadd.f32 %v376, %v459
        %461 = vmatprep.mubr.f32.mxu0 %v272
        %462 = vmatmul.mubr.f32.gmra.mrb[0].mxu0 %v271
        %v463 = vpop.f32.mrb[0].mxu0
        %v464 = vadd.f32 %v372, %v463
        %v465 = vpop.f32.mrb[0].mxu0
        %v466 = vadd.f32 %v376, %v465
        %467 = vmatprep.mubr.f32.mxu0 %v274
        %468 = vmatmul.mubr.f32.gmra.mrb[0].mxu0 %v273
        %v469 = vpop.f32.mrb[0].mxu0
        %v470 = vadd.f32 %v372, %v469
        %v471 = vpop.f32.mrb[0].mxu0
        %v472 = vadd.f32 %v376, %v471
        %473 = vmatprep.mubr.f32.mxu0 %v276
        %474 = vmatmul.mubr.f32.gmra.mrb[0].mxu0 %v275
        %v475 = vpop.f32.mrb[0].mxu0
        %v476 = vadd.f32 %v372, %v475
        %v477 = vpop.f32.mrb[0].mxu0
        %v478 = vadd.f32 %v376, %v477
        %479 = vmatprep.mubr.f32.mxu0 %v278
        %480 = vmatmul.mubr.f32.gmra.mrb[0].mxu0 %v277
        %v481 = vpop.f32.mrb[0].mxu0
        %v482 = vadd.f32 %v372, %v481
        %v483 = vpop.f32.mrb[0].mxu0
        %v484 = vadd.f32 %v376, %v483
        %485 = vmatprep.mubr.f32.mxu0 %v280
        %486 = vmatmul.mubr.f32.gmra.mrb[0].mxu0 %v279
        %v487 = vpop.f32.mrb[0].mxu0
        %v488 = vadd.f32 %v372, %v487
        %v489 = vpop.f32.mrb[0].mxu0
        %v490 = vadd.f32 %v376, %v489
        %491 = vmatprep.mubr.f32.mxu0 %v282
        %492 = vmatmul.mubr.f32.gmra.mrb[0].mxu0 %v281
        %v493 = vpop.f32.mrb[0].mxu0
        %v494 = vadd.f32 %v372, %v493
        %v495 = vpop.f32.mrb[0].mxu0
        %v496 = vadd.f32 %v376, %v495
        %497 = vmatprep.mubr.f32.mxu0 %v284
        %498 = vmatmul.mubr.f32.gmra.mrb[0].mxu0 %v283
        %v499 = vpop.f32.mrb[0].mxu0
        %v500 = vadd.f32 %v372, %v499
        %v501 = vpop.f32.mrb[0].mxu0
        %v502 = vadd.f32 %v376, %v501
        %503 = vmatprep.mubr.f32.mxu0 %v286
        %504 = vmatmul.mubr.f32.gmra.mrb[0].mxu0 %v285
        %v505 = vpop.f32.mrb[0].mxu0
        %v506 = vadd.f32 %v372, %v505
        %v507 = vpop.f32.mrb[0].mxu0
        %v508 = vadd.f32 %v376, %v507
        %509 = vmatprep.mubr.f32.mxu0 %v288
        %510 = vmatmul.mubr.f32.gmra.mrb[0].mxu0 %v287
        %v511 = vpop.f32.mrb[0].mxu0
        %v512 = vadd.f32 %v372, %v511
        %v513 = vpop.f32.mrb[0].mxu0
        %v514 = vadd.f32 %v376, %v513
        %515 = vmatprep.mubr.f32.mxu0 %v290
        %516 = vmatmul.mubr.f32.gmra.mrb[0].mxu0 %v289
        %v517 = vpop.f32.mrb[0].mxu0
        %v518 = vadd.f32 %v372, %v517
        %v519 = vpop.f32.mrb[0].mxu0
        %v520 = vadd.f32 %v376, %v519
        %521 = vmatprep.mubr.f32.mxu0 %v292
        %522 = vmatmul.mubr.f32.gmra.mrb[0].mxu0 %v291
        %v523 = vpop.f32.mrb[0].mxu0
        %v524 = vadd.f32 %v372, %v523
        %v525 = vpop.f32.mrb[0].mxu0
        %v526 = vadd.f32 %v376, %v525
        %527 = vmatprep.mubr.f32.mxu0 %v294
        %528 = vmatmul.mubr.f32.gmra.mrb[0].mxu0 %v293
        %v529 = vpop.f32.mrb[0].mxu0
        %v530 = vadd.f32 %v372, %v529
        %v531 = vpop.f32.mrb[0].mxu0
        %v532 = vadd.f32 %v376, %v531
        %533 = vmatprep.mubr.f32.mxu0 %v296
        %534 = vmatmul.mubr.f32.gmra.mrb[0].mxu0 %v295
        %v535 = vpop.f32.mrb[0].mxu0
        %v536 = vadd.f32 %v372, %v535
        %v537 = vpop.f32.mrb[0].mxu0
        %v538 = vadd.f32 %v376, %v537
        %539 = vmatprep.mubr.f32.mxu0 %v298
        %540 = vmatmul.mubr.f32.gmra.mrb[0].mxu0 %v297
        %v541 = vpop.f32.mrb[0].mxu0
        %v542 = vadd.f32 %v372, %v541
        %v543 = vpop.f32.mrb[0].mxu0
        %v544 = vadd.f32 %v376, %v543
        %545 = vmatprep.mubr.f32.mxu0 %v300
        %546 = vmatmul.mubr.f32.gmra.mrb[0].mxu0 %v299
        %v547 = vpop.f32.mrb[0].mxu0
        %v548 = vadd.f32 %v372, %v547
        %v549 = vpop.f32.mrb[0].mxu0
        %v550 = vadd.f32 %v376, %v549
        %551 = vmatprep.mubr.f32.mxu0 %v302
        %552 = vmatmul.mubr.f32.gmra.mrb[0].mxu0 %v301
        %v553 = vpop.f32.mrb[0].mxu0
        %v554 = vadd.f32 %v372, %v553
        %v555 = vpop.f32.mrb[0].mxu0
        %v556 = vadd.f32 %v376, %v555
        %557 = vdwg.mxu0
        %v558 = vtanh.pop %v446
        %v559 = vtanh.pop %v452
        %v560 = vtanh.pop %v458
        %v561 = vtanh.pop %v464
        %v562 = vtanh.pop %v470
        %v563 = vtanh.pop %v476
        %v564 = vtanh.pop %v482
        %v565 = vtanh.pop %v488
        %v566 = vtanh.pop %v494
        %v567 = vtanh.pop %v500
        %v568 = vtanh.pop %v506
        %v569 = vtanh.pop %v512
        %v570 = vtanh.pop %v518
        %v571 = vtanh.pop %v524
        %v572 = vtanh.pop %v530
        %v573 = vtanh.pop %v536
        %v574 = vtanh.pop %v542
        %v575 = vtanh.pop %v548
        %v576 = vtanh.pop %v554
        %v577 = vxor.u32 %v448, 2147483648
        %v578 = vxor.u32 %v454, 2147483648
        %v579 = vxor.u32 %v460, 2147483648
        %v580 = vxor.u32 %v466, 2147483648
        %v581 = vxor.u32 %v472, 2147483648
        %v582 = vxor.u32 %v478, 2147483648
        %v583 = vxor.u32 %v484, 2147483648
        %v584 = vxor.u32 %v490, 2147483648
        %v585 = vxor.u32 %v496, 2147483648
        %v586 = vxor.u32 %v502, 2147483648
        %v587 = vxor.u32 %v508, 2147483648
        %v588 = vxor.u32 %v514, 2147483648
        %v589 = vxor.u32 %v520, 2147483648
        %v590 = vxor.u32 %v526, 2147483648
        %v591 = vxor.u32 %v532, 2147483648
        %v592 = vxor.u32 %v538, 2147483648
        %v593 = vxor.u32 %v544, 2147483648
        %v594 = vxor.u32 %v550, 2147483648
        %v595 = vxor.u32 %v556, 2147483648
        %v596 = vmul.f32 %v577, 1.442695
        %v597 = vpow.pop %v596
        %v598 = vmul.f32 %v578, 1.442695
        %v599 = vpow.pop %v598
        %v600 = vmul.f32 %v579, 1.442695
        %v601 = vpow.pop %v600
        %v602 = vmul.f32 %v580, 1.442695
        %v603 = vpow.pop %v602
        %v604 = vmul.f32 %v581, 1.442695
        %v605 = vpow.pop %v604
        %v606 = vmul.f32 %v582, 1.442695
        %v607 = vpow.pop %v606
        %v608 = vmul.f32 %v583, 1.442695
        %v609 = vpow.pop %v608
        %v610 = vmul.f32 %v584, 1.442695
        %v611 = vpow.pop %v610
        %v612 = vmul.f32 %v585, 1.442695
        %v613 = vpow.pop %v612
        %v614 = vmul.f32 %v586, 1.442695
        %v615 = vpow.pop %v614
        %v616 = vmul.f32 %v587, 1.442695
        %v617 = vpow.pop %v616
        %v618 = vmul.f32 %v588, 1.442695
        %v619 = vpow.pop %v618
        %v620 = vmul.f32 %v589, 1.442695
        %v621 = vpow.pop %v620
        %v622 = vmul.f32 %v590, 1.442695
        %v623 = vpow.pop %v622
        %v624 = vmul.f32 %v591, 1.442695
        %v625 = vpow.pop %v624
        %v626 = vmul.f32 %v592, 1.442695
        %v627 = vpow.pop %v626
        %v628 = vmul.f32 %v593, 1.442695
        %v629 = vpow.pop %v628
        %v630 = vmul.f32 %v594, 1.442695
        %v631 = vpow.pop %v630
        %v632 = vmul.f32 %v595, 1.442695
        %v633 = vpow.pop %v632
        %v634 = vadd.f32 %v597, 1.0
        %v635 = vadd.f32 %v599, 1.0
        %v636 = vadd.f32 %v601, 1.0
        %v637 = vadd.f32 %v603, 1.0
        %v638 = vadd.f32 %v605, 1.0
        %v639 = vadd.f32 %v607, 1.0
        %v640 = vadd.f32 %v609, 1.0
        %v641 = vadd.f32 %v611, 1.0
        %v642 = vadd.f32 %v613, 1.0
        %v643 = vadd.f32 %v615, 1.0
        %v644 = vadd.f32 %v617, 1.0
        %v645 = vadd.f32 %v619, 1.0
        %v646 = vadd.f32 %v621, 1.0
        %v647 = vadd.f32 %v623, 1.0
        %v648 = vadd.f32 %v625, 1.0
        %v649 = vadd.f32 %v627, 1.0
        %v650 = vadd.f32 %v629, 1.0
        %v651 = vadd.f32 %v631, 1.0
        %v652 = vadd.f32 %v633, 1.0
        %v653 = vrcp.pop %v634
        %v654 = vmul.f32 1.0, %v653
        %v655 = vrcp.pop %v635
        %v656 = vmul.f32 1.0, %v655
        %v657 = vrcp.pop %v636
        %v658 = vmul.f32 1.0, %v657
        %v659 = vrcp.pop %v637
        %v660 = vmul.f32 1.0, %v659
        %v661 = vrcp.pop %v638
        %v662 = vmul.f32 1.0, %v661
        %v663 = vrcp.pop %v639
        %v664 = vmul.f32 1.0, %v663
        %v665 = vrcp.pop %v640
        %v666 = vmul.f32 1.0, %v665
        %v667 = vrcp.pop %v641
        %v668 = vmul.f32 1.0, %v667
        %v669 = vrcp.pop %v642
        %v670 = vmul.f32 1.0, %v669
        %v671 = vrcp.pop %v643
        %v672 = vmul.f32 1.0, %v671
        %v673 = vrcp.pop %v644
        %v674 = vmul.f32 1.0, %v673
        %v675 = vrcp.pop %v645
        %v676 = vmul.f32 1.0, %v675
        %v677 = vrcp.pop %v646
        %v678 = vmul.f32 1.0, %v677
        %v679 = vrcp.pop %v647
        %v680 = vmul.f32 1.0, %v679
        %v681 = vrcp.pop %v648
        %v682 = vmul.f32 1.0, %v681
        %v683 = vrcp.pop %v649
        %v684 = vmul.f32 1.0, %v683
        %v685 = vrcp.pop %v650
        %v686 = vmul.f32 1.0, %v685
        %v687 = vrcp.pop %v651
        %v688 = vmul.f32 1.0, %v687
        %v689 = vrcp.pop %v652
        %v690 = vmul.f32 1.0, %v689
        %v691 = vmul.f32 %v558, %v654
        %v692 = vmul.f32 %v559, %v656
        %v693 = vmul.f32 %v560, %v658
        %v694 = vmul.f32 %v561, %v660
        %v695 = vmul.f32 %v562, %v662
        %v696 = vmul.f32 %v563, %v664
        %v697 = vmul.f32 %v564, %v666
        %v698 = vmul.f32 %v565, %v668
        %v699 = vmul.f32 %v566, %v670
        %v700 = vmul.f32 %v567, %v672
        %v701 = vmul.f32 %v568, %v674
        %v702 = vmul.f32 %v569, %v676
        %v703 = vmul.f32 %v570, %v678
        %v704 = vmul.f32 %v571, %v680
        %v705 = vmul.f32 %v572, %v682
        %v706 = vmul.f32 %v573, %v684
        %v707 = vmul.f32 %v574, %v686
        %v708 = vmul.f32 %v575, %v688
        %v709 = vmul.f32 %v576, %v690
        %v710 = vld [vmem:[%s3] sm:$0x1]
        %v712 = vlaneseq
        %v713 = vshrl.u32 %v712, 7
        %v714 = vsub.s32 0, %v713
        %v715 = vrot.slane %v710, %v714
        %v717 = vmul.f32 %v691, %v715
        %v718 = vmul.f32 %v692, %v715
        %v719 = vmul.f32 %v693, %v715
        %v720 = vmul.f32 %v694, %v715
        %v721 = vmul.f32 %v695, %v715
        %v722 = vmul.f32 %v696, %v715
        %v723 = vmul.f32 %v697, %v715
        %v724 = vmul.f32 %v698, %v715
        %v725 = vmul.f32 %v699, %v715
        %v726 = vmul.f32 %v700, %v715
        %v727 = vmul.f32 %v701, %v715
        %v728 = vmul.f32 %v702, %v715
        %v729 = vmul.f32 %v703, %v715
        %v730 = vmul.f32 %v704, %v715
        %v731 = vmul.f32 %v705, %v715
        %v732 = vmul.f32 %v706, %v715
        %v733 = vmul.f32 %v707, %v715
        %v734 = vmul.f32 %v708, %v715
        %v735 = vmul.f32 %v709, %v715
        %736 = vadd.xlane.f32.xlu0 %v717
        %v737 = vpop.xlane.xlu0 %736
        %738 = vadd.xlane.f32.xlu0 %v718
        %v739 = vpop.xlane.xlu0 %738
        %740 = vadd.xlane.f32.xlu0 %v719
        %v741 = vpop.xlane.xlu0 %740
        %742 = vadd.xlane.f32.xlu0 %v720
        %v743 = vpop.xlane.xlu0 %742
        %744 = vadd.xlane.f32.xlu0 %v721
        %v745 = vpop.xlane.xlu0 %744
        %746 = vadd.xlane.f32.xlu0 %v722
        %v747 = vpop.xlane.xlu0 %746
        %748 = vadd.xlane.f32.xlu0 %v723
        %v749 = vpop.xlane.xlu0 %748
        %750 = vadd.xlane.f32.xlu0 %v724
        %v751 = vpop.xlane.xlu0 %750
        %752 = vadd.xlane.f32.xlu0 %v725
        %v753 = vpop.xlane.xlu0 %752
        %754 = vadd.xlane.f32.xlu0 %v726
        %v755 = vpop.xlane.xlu0 %754
        %756 = vadd.xlane.f32.xlu0 %v727
        %v757 = vpop.xlane.xlu0 %756
        %758 = vadd.xlane.f32.xlu0 %v728
        %v759 = vpop.xlane.xlu0 %758
        %760 = vadd.xlane.f32.xlu0 %v729
        %v761 = vpop.xlane.xlu0 %760
        %762 = vadd.xlane.f32.xlu0 %v730
        %v763 = vpop.xlane.xlu0 %762
        %764 = vadd.xlane.f32.xlu0 %v731
        %v765 = vpop.xlane.xlu0 %764
        %766 = vadd.xlane.f32.xlu0 %v732
        %v767 = vpop.xlane.xlu0 %766
        %768 = vadd.xlane.f32.xlu0 %v733
        %v769 = vpop.xlane.xlu0 %768
        %770 = vadd.xlane.f32.xlu0 %v734
        %v771 = vpop.xlane.xlu0 %770
        %772 = vadd.xlane.f32.xlu0 %v735
        %v773 = vpop.xlane.xlu0 %772
        %v774 = vld [vmem:[#allocation2] sm:$0x1]
        %v776 = vlaneseq
        %v777 = vshrl.u32 %v776, 7
        %v778 = vsub.s32 0, %v777
        %v779 = vrot.slane %v774, %v778
        %v781 = vadd.f32 %v737, %v779
        %v782 = vadd.f32 %v739, %v779
        %v783 = vadd.f32 %v741, %v779
        %v784 = vadd.f32 %v743, %v779
        %v785 = vadd.f32 %v745, %v779
        %v786 = vadd.f32 %v747, %v779
        %v787 = vadd.f32 %v749, %v779
        %v788 = vadd.f32 %v751, %v779
        %v789 = vadd.f32 %v753, %v779
        %v790 = vadd.f32 %v755, %v779
        %v791 = vadd.f32 %v757, %v779
        %v792 = vadd.f32 %v759, %v779
        %v793 = vadd.f32 %v761, %v779
        %v794 = vadd.f32 %v763, %v779
        %v795 = vadd.f32 %v765, %v779
        %v796 = vadd.f32 %v767, %v779
        %v797 = vadd.f32 %v769, %v779
        %v798 = vadd.f32 %v771, %v779
        %v799 = vadd.f32 %v773, %v779
        %vm800 = vcmask 7168
        %801 = vst.msk [vmem:[%s263] sm:$0xff] %vm800, %v781
        %802 = vst.msk [vmem:[%s263 + $0x8] sm:$0xff] %vm800, %v782
        %803 = vst.msk [vmem:[%s263 + $0x10] sm:$0xff] %vm800, %v783
        %804 = vst.msk [vmem:[%s263 + $0x18] sm:$0xff] %vm800, %v784
        %805 = vst.msk [vmem:[%s263 + $0x20] sm:$0xff] %vm800, %v785
        %806 = vst.msk [vmem:[%s263 + $0x28] sm:$0xff] %vm800, %v786
        %807 = vst.msk [vmem:[%s263 + $0x30] sm:$0xff] %vm800, %v787
        %808 = vst.msk [vmem:[%s263 + $0x38] sm:$0xff] %vm800, %v788
        %809 = vst.msk [vmem:[%s263 + $0x40] sm:$0xff] %vm800, %v789
        %810 = vst.msk [vmem:[%s263 + $0x48] sm:$0xff] %vm800, %v790
        %811 = vst.msk [vmem:[%s263 + $0x50] sm:$0xff] %vm800, %v791
        %812 = vst.msk [vmem:[%s263 + $0x58] sm:$0xff] %vm800, %v792
        %813 = vst.msk [vmem:[%s263 + $0x60] sm:$0xff] %vm800, %v793
        %814 = vst.msk [vmem:[%s263 + $0x68] sm:$0xff] %vm800, %v794
        %815 = vst.msk [vmem:[%s263 + $0x70] sm:$0xff] %vm800, %v795
        %816 = vst.msk [vmem:[%s263 + $0x78] sm:$0xff] %vm800, %v796
        %817 = vst.msk [vmem:[%s263 + $0x80] sm:$0xff] %vm800, %v797
        %818 = vst.msk [vmem:[%s263 + $0x88] sm:$0xff] %vm800, %v798
        %819 = vst.msk [vmem:[%s263 + $0x90] sm:$0xff] %vm800, %v799
        %s820 = smul.u32 19, %s22
        %p821 = scmp.lt.s32.totalorder %s820, 37
        %s822 = scalar_select %p821, %s820, 37
        %s823 = smul.addr %s822, 8
        %s824 = scalar_lea.vmem %s5, %s823
        // Predicated region
        $region49: #{tpu_custom_call.1} parent=39 // pred_check
          %p825 = pneg %p150
        $region50: #{tpu_custom_call.1} parent=39 // pred_check_branch
          %827 = sbr.rel (%p825) target = $region52
        $region51: #{tpu_custom_call.1} parent=39 // pred_region
          %s828 = smul.u32 19, %s22
        $region52: #{tpu_custom_call.1} parent=39 // pred_fallthru
          _
      $region40: #{tpu_custom_call.1} parent=5 // pred_fallthru
        _
      %p829 = scmp.le.s32.totalorder 2, %s17
      // Predicated region
      $region53: #{tpu_custom_call.1} parent=5 // pred_check
        %p830 = pneg %p829
      $region54: #{tpu_custom_call.1} parent=5 // pred_check_branch
        %832 = sbr.rel (%p830) target = $region56
      $region55: #{tpu_custom_call.1} parent=5 // pred_region
        %s833 = ssub.s32 %s17, 2
        // Predicated region
        $region57: #{tpu_custom_call.1} parent=55 // pred_check
          %p834 = pneg %p156
        $region58: #{tpu_custom_call.1} parent=55 // pred_check_branch
          %836 = sbr.rel (%p834) target = $region60
        $region59: #{tpu_custom_call.1} parent=55 // pred_region
          %s837 = smul.u32 19, %s23
          %p838 = scmp.lt.s32.totalorder %s837, 37
          %s839 = scalar_select %p838, %s837, 37
          %s840 = smul.addr %s839, 8
          %s841 = scalar_lea.vmem %s5, %s840
        $region60: #{tpu_custom_call.1} parent=55 // pred_fallthru
          _
      $region56: #{tpu_custom_call.1} parent=5 // pred_fallthru
        _
    $region6: #{tpu_custom_call.1} parent=1 // loop_footer
      %s21 = sadd.s32 1, %s17
    $region7: #{tpu_custom_call.1} parent=1 // loop_footer_branch
      %16 = sbr.rel target = $region3
    $region8: #{tpu_custom_call.1} parent=1 // loop_exit
      _
    %842 = vsyncpa [#allocation4], 1
    %s843 = scalar_lea.sflag [#allocation4], 1
    %844 = vsyncpa %s843, 1
    %845 = vsyncpa [#allocation6], 1

</llo_original>
